<compile_context>
chip_gen: v7x
topology: tpu7x:2x2x1
jax: 0.10.0
libtpu: 0.0.40
codegen_flags: <defaults>
</compile_context>

<pallas_src>
import jax
import jax.numpy as jnp
from jax.experimental import pallas as pl
from jax.experimental.pallas import tpu as pltpu

_LANE = 128          # TPU lane width
_TILE_N_MAX = 32768  # (32, 32768) f32 hidden = 4 MiB -> safe on v7x 64 MiB VMEM


def _mlp_kernel(xt_ref, p_ref, o_ref):
    # xt: (1, tile_n)  -- batch on the lane axis
    # p:  (H, 4)       -- packed columns: [w1, b1, w2, b2(bcast)]
    x = xt_ref[...]                       # (1, tile_n)
    w1 = p_ref[:, 0:1]                    # (H, 1)
    b1 = p_ref[:, 1:2]                    # (H, 1)
    w2 = p_ref[:, 2:3]                    # (H, 1)
    b2 = p_ref[0:1, 3:4]                  # (1, 1)

    # hidden = relu(x * w1 + b1): broadcast (H,1)*(1,tile_n) -> (H,tile_n)  (VPU)
    h = jnp.maximum(w1 * x + b1, 0.0)
    # out = sum_H(w2 * h) + b2: sublane reduce over H (XLU), stays in f32
    out = jnp.sum(w2 * h, axis=0, keepdims=True) + b2
    o_ref[...] = out.astype(o_ref.dtype)  # (1, tile_n), lane-dense unmasked store


def net_forward(x, w1, b1, w2, b2):
    """x: (N, F=1); w1: (F, H); b1: (1, H); w2: (H, O=1); b2: (1, O) -> (N, O).

    Computes relu(x @ w1 + b1) @ w2 + b2 in a single fused Pallas kernel.
    Specialized to F == 1 and O == 1 (the shapes this module is used with).
    """
    n, f = x.shape
    h_dim = w1.shape[1]
    o_dim = w2.shape[1]
    assert f == 1 and o_dim == 1, "kernel is specialized to n_feature=1, n_output=1"

    # --- wrapper-side layout plumbing -------------------------------------
    # Lane tile: whole (lane-padded) batch for small N; capped + gridded for
    # large N so v7x's two TensorCores can split the rows.
    if n <= _TILE_N_MAX:
        tile_n = pl.cdiv(n, _LANE) * _LANE
        n_pad = tile_n
    else:
        tile_n = _TILE_N_MAX
        n_pad = pl.cdiv(n, tile_n) * tile_n
    grid = (n_pad // tile_n,)

    # Batch on the lane axis, zero-padded up to n_pad (padded lanes compute
    # garbage but are sliced away; lanes are independent so this is safe).
    xt = jnp.pad(x.reshape(1, n), ((0, 0), (0, n_pad - n)))

    # Pack the tiny parameters into one (H, 4) block: one DMA, one VMEM tile.
    params = jnp.concatenate(
        [
            w1.reshape(h_dim, 1),                              # col 0: w1
            b1.reshape(h_dim, 1),                              # col 1: b1
            w2.reshape(h_dim, 1),                              # col 2: w2
            jnp.broadcast_to(b2.reshape(1, 1), (h_dim, 1)),    # col 3: b2
        ],
        axis=1,
    ).astype(x.dtype)

    elem_bytes = jnp.dtype(x.dtype).itemsize
    cost = pl.CostEstimate(
        flops=2 * n * (f * h_dim + h_dim * o_dim),
        transcendentals=0,
        bytes_accessed=(x.size + params.size + n * o_dim) * elem_bytes,
    )

    out_t = pl.pallas_call(
        _mlp_kernel,
        out_shape=jax.ShapeDtypeStruct((1, n_pad), x.dtype),
        grid=grid,
        in_specs=[
            pl.BlockSpec((1, tile_n), lambda i: (0, i)),   # xt: lane tiles
            pl.BlockSpec((h_dim, 4), lambda i: (0, 0)),    # packed params
        ],
        out_specs=pl.BlockSpec((1, tile_n), lambda i: (0, i)),
        compiler_params=pltpu.CompilerParams(
            dimension_semantics=("parallel",),
        ),
        cost_estimate=cost,
    )(xt, params)

    return out_t[:, :n].reshape(n, o_dim)


def init_params(key, n_feature, n_hidden, n_output, dtype=jnp.float32):
    """Deterministic init mimicking torch.nn.Linear's U(-1/sqrt(fan_in), +)."""
    k1, k2, k3, k4 = jax.random.split(key, 4)
    bound1 = 1.0 / jnp.sqrt(jnp.float32(n_feature))
    bound2 = 1.0 / jnp.sqrt(jnp.float32(n_hidden))
    w1 = jax.random.uniform(k1, (n_feature, n_hidden), dtype, -bound1, bound1)
    b1 = jax.random.uniform(k2, (1, n_hidden), dtype, -bound1, bound1)
    w2 = jax.random.uniform(k3, (n_hidden, n_output), dtype, -bound2, bound2)
    b2 = jax.random.uniform(k4, (1, n_output), dtype, -bound2, bound2)
    return w1, b1, w2, b2


if __name__ == "__main__":
    # Matches the reference script: x = unsqueeze(linspace(-1, 1, 200), dim=1)
    N, n_feature, n_hidden, n_output = 200, 1, 32, 1

    key = jax.random.PRNGKey(0)
    w1, b1, w2, b2 = init_params(key, n_feature, n_hidden, n_output)

    x = jnp.linspace(-1.0, 1.0, N, dtype=jnp.float32).reshape(N, 1)

    out = net_forward(x, w1, b1, w2, b2)
    out = jax.block_until_ready(out)

    # Pure-JAX reference check (f32 end-to-end).
    ref = jnp.maximum(x @ w1 + b1, 0.0) @ w2 + b2
    assert out.shape == (N, n_output)
    assert jnp.allclose(out, ref, atol=1e-5, rtol=1e-5)

    print("KERNEL_OK")
</pallas_src>

<mosaic_0001>
module attributes {stable_mosaic.version = 11 : i64} {
  func.func @_mlp_kernel(%arg0: i32, %arg1: memref<1x256xf32, #tpu.memory_space<vmem>>, %arg2: memref<32x4xf32, #tpu.memory_space<vmem>>, %arg3: memref<1x256xf32, #tpu.memory_space<vmem>>) attributes {dimension_semantics = [#tpu.dimension_semantics<parallel>], iteration_bounds = array<i64: 1>, scalar_prefetch = 0 : i64, scratch_operands = 0 : i64, tpu.core_type = #tpu.core_type<tc>, window_params = [{transform_indices = @transform_0, window_bounds = array<i64: 1, 256>}, {pipeline_mode = #tpu.pipeline_mode<synchronous>, transform_indices = @transform_1, window_bounds = array<i64: 32, 4>}, {transform_indices = @transform_2, window_bounds = array<i64: 1, 256>}]} {
    %c0 = arith.constant 0 : index
    %c0_0 = arith.constant 0 : index
    %0 = vector.load %arg1[%c0, %c0_0] : memref<1x256xf32, #tpu.memory_space<vmem>>, vector<1x256xf32>
    %c0_1 = arith.constant 0 : index
    %c0_2 = arith.constant 0 : index
    %1 = vector.load %arg2[%c0_1, %c0_2] : memref<32x4xf32, #tpu.memory_space<vmem>>, vector<32x1xf32>
    %c0_3 = arith.constant 0 : index
    %c1 = arith.constant 1 : index
    %2 = vector.load %arg2[%c0_3, %c1] : memref<32x4xf32, #tpu.memory_space<vmem>>, vector<32x1xf32>
    %c0_4 = arith.constant 0 : index
    %c2 = arith.constant 2 : index
    %3 = vector.load %arg2[%c0_4, %c2] : memref<32x4xf32, #tpu.memory_space<vmem>>, vector<32x1xf32>
    %c0_5 = arith.constant 0 : index
    %c3 = arith.constant 3 : index
    %4 = vector.load %arg2[%c0_5, %c3] : memref<32x4xf32, #tpu.memory_space<vmem>>, vector<1x1xf32>
    %5 = vector.broadcast %1 : vector<32x1xf32> to vector<32x256xf32>
    %6 = vector.broadcast %0 : vector<1x256xf32> to vector<32x256xf32>
    %7 = arith.mulf %5, %6 : vector<32x256xf32>
    %8 = vector.broadcast %2 : vector<32x1xf32> to vector<32x256xf32>
    %9 = arith.addf %7, %8 : vector<32x256xf32>
    %cst = arith.constant 0.000000e+00 : f32
    %10 = vector.broadcast %cst : f32 to vector<32x256xf32>
    %11 = arith.maximumf %9, %10 : vector<32x256xf32>
    %12 = vector.broadcast %3 : vector<32x1xf32> to vector<32x256xf32>
    %13 = arith.mulf %12, %11 : vector<32x256xf32>
    %cst_6 = arith.constant dense<0.000000e+00> : vector<256xf32>
    %14 = vector.multi_reduction <add>, %13, %cst_6 [0] : vector<32x256xf32> to vector<256xf32>
    %15 = vector.shape_cast %14 : vector<256xf32> to vector<1x256xf32>
    %16 = vector.broadcast %4 : vector<1x1xf32> to vector<1x256xf32>
    %17 = arith.addf %15, %16 : vector<1x256xf32>
    %c0_7 = arith.constant 0 : index
    %c0_8 = arith.constant 0 : index
    %18 = vector.load %arg3[%c0_7, %c0_8] : memref<1x256xf32, #tpu.memory_space<vmem>>, vector<1x256xf32>
    tpu.vector_store %arg3[%c0_7, %c0_8], %17 {strides = array<i32>} : memref<1x256xf32, #tpu.memory_space<vmem>>, vector<1x256xf32>,
    return
  }
  func.func @transform_0(%arg0: i32) -> (i32, i32) {
    %c0_i32 = arith.constant 0 : i32
    %c0_i32_0 = arith.constant 0 : i32
    return %c0_i32, %arg0 : i32, i32
  }
  func.func @transform_1(%arg0: i32) -> (i32, i32) {
    %c0_i32 = arith.constant 0 : i32
    %c0_i32_0 = arith.constant 0 : i32
    %c0_i32_1 = arith.constant 0 : i32
    return %c0_i32, %c0_i32_0 : i32, i32
  }
  func.func @transform_2(%arg0: i32) -> (i32, i32) {
    %c0_i32 = arith.constant 0 : i32
    %c0_i32_0 = arith.constant 0 : i32
    return %c0_i32, %arg0 : i32, i32
  }
}

</mosaic_0001>

<llo_original>
// kernel: tpu_custom_call.1
$region0: #{tpu_custom_call.1}
  #allocation0 [shape = 'u32[]', space=smem, size = 0x4, offset = 0x4, fixed_abs, tag = 'smem constant byte address 0x4 - core index']
  #allocation1 [shape = 'u32[144,128]{1,0:T(1,128)}', space=vmem, size = 0x12000, scoped, tag = 'internal scratch']
  %s0 = inlined_call_operand.vmem [shape: f32[1,256], index: 0, kind: input, shape index: {}]
  %s1 = inlined_call_operand.vmem [shape: f32[32,4], index: 1, kind: input, shape index: {}]
  %s2 = inlined_call_operand.hbm [shape: f32[1,256], index: 2, kind: output, shape index: {}]
  %s3 = sld [smem:[#allocation0]]
  $region18: #{tpu_custom_call.1} parent=0
    _
  %s5 = ssub.s32 1, %s3
  %s6 = scalar_select 0, %s5, %s3
  $region1: #{tpu_custom_call.1} parent=0
    #allocation2 [shape = 'u8[1024]{0}', space=vmem, size = 0x400, scoped, tag = 'output window, operand 0, single buffered']
    #allocation3 [shape = 's32[1]{0}', space=sflag, size = 0x4, scoped, tag = 'scoped memory for tpu_custom_call.1']
    %7 = vsyncpa [#allocation3], 0
    // Predicated region
    $region2: #{tpu_custom_call.1} parent=1 // pred_check
      _
    $region3: #{tpu_custom_call.1} parent=1 // pred_check_branch
      %9 = sbr.rel (0) target = $region5
    $region4: #{tpu_custom_call.1} parent=1 // pred_region
      _
    $region5: #{tpu_custom_call.1} parent=1 // pred_fallthru
      _
    // Predicated region
    $region6: #{tpu_custom_call.1} parent=1 // pred_check
      _
    $region7: #{tpu_custom_call.1} parent=1 // pred_check_branch
      %11 = sbr.rel (0) target = $region9
    $region8: #{tpu_custom_call.1} parent=1 // pred_region
      _
    $region9: #{tpu_custom_call.1} parent=1 // pred_fallthru
      _
    %v12 = vld [vmem:[%s0] sm:$0x3]
    %v13 = vld [vmem:[%s1] sm:$0xff]
    %v14 = vld [vmem:[%s1 + $0x8] sm:$0xff]
    %v15 = vld [vmem:[%s1 + $0x10] sm:$0xff]
    %v16 = vld [vmem:[%s1 + $0x18] sm:$0xff]
    %v17 = vld [vmem:[%s1] sm:$0x1]
    %19 = vset.pattern.permute.xlu0 0
    %20 = vperm.xlu0 %19, %v13
    %v21 = vpop.permute.xlu0 %20
    %24 = vset.pattern.permute.xlu0 0
    %25 = vperm.xlu0 %24, %v14
    %v26 = vpop.permute.xlu0 %25
    %29 = vset.pattern.permute.xlu0 0
    %30 = vperm.xlu0 %29, %v15
    %v31 = vpop.permute.xlu0 %30
    %34 = vset.pattern.permute.xlu0 0
    %35 = vperm.xlu0 %34, %v16
    %v36 = vpop.permute.xlu0 %35
    %v39 = vlaneseq
    %v40 = vshrl.u32 %v39, 7
    %v41 = vsub.s32 0, %v40
    %v42 = vrot.slane %v12, %v41
    %v43 = vlaneseq
    %v44 = vshrl.u32 %v43, 7
    %v45 = vsub.s32 1, %v44
    %v46 = vrot.slane %v12, %v45
    %v49 = vmul.f32 %v21, %v42
    %v50 = vmul.f32 %v21, %v46
    %v51 = vmul.f32 %v26, %v42
    %v52 = vmul.f32 %v26, %v46
    %v53 = vmul.f32 %v31, %v42
    %v54 = vmul.f32 %v31, %v46
    %v55 = vmul.f32 %v36, %v42
    %v56 = vmul.f32 %v36, %v46
    %57 = vset.pattern.permute.xlu0 1
    %58 = vperm.xlu0 %57, %v13
    %v59 = vpop.permute.xlu0 %58
    %61 = vset.pattern.permute.xlu0 1
    %62 = vperm.xlu0 %61, %v14
    %v63 = vpop.permute.xlu0 %62
    %65 = vset.pattern.permute.xlu0 1
    %66 = vperm.xlu0 %65, %v15
    %v67 = vpop.permute.xlu0 %66
    %69 = vset.pattern.permute.xlu0 1
    %70 = vperm.xlu0 %69, %v16
    %v71 = vpop.permute.xlu0 %70
    %v73 = vadd.f32 %v49, %v59
    %v74 = vadd.f32 %v50, %v59
    %v75 = vadd.f32 %v51, %v63
    %v76 = vadd.f32 %v52, %v63
    %v77 = vadd.f32 %v53, %v67
    %v78 = vadd.f32 %v54, %v67
    %v79 = vadd.f32 %v55, %v71
    %v80 = vadd.f32 %v56, %v71
    %v81 = vmax.f32 %v73, 0.0
    %v82 = vmax.f32 %v74, 0.0
    %v83 = vmax.f32 %v75, 0.0
    %v84 = vmax.f32 %v76, 0.0
    %v85 = vmax.f32 %v77, 0.0
    %v86 = vmax.f32 %v78, 0.0
    %v87 = vmax.f32 %v79, 0.0
    %v88 = vmax.f32 %v80, 0.0
    %89 = vset.pattern.permute.xlu0 2
    %90 = vperm.xlu0 %89, %v13
    %v91 = vpop.permute.xlu0 %90
    %93 = vset.pattern.permute.xlu0 2
    %94 = vperm.xlu0 %93, %v14
    %v95 = vpop.permute.xlu0 %94
    %97 = vset.pattern.permute.xlu0 2
    %98 = vperm.xlu0 %97, %v15
    %v99 = vpop.permute.xlu0 %98
    %101 = vset.pattern.permute.xlu0 2
    %102 = vperm.xlu0 %101, %v16
    %v103 = vpop.permute.xlu0 %102
    %v105 = vmul.f32 %v91, %v81
    %v106 = vmul.f32 %v91, %v82
    %v107 = vmul.f32 %v95, %v83
    %v108 = vmul.f32 %v95, %v84
    %v109 = vmul.f32 %v99, %v85
    %v110 = vmul.f32 %v99, %v86
    %v111 = vmul.f32 %v103, %v87
    %v112 = vmul.f32 %v103, %v88
    %v113 = vadd.f32 %v105, %v107
    %v114 = vadd.f32 %v113, %v109
    %v115 = vadd.f32 %v114, %v111
    %v116 = vrot.slane %v115, 4
    %v117 = vadd.f32 %v115, %v116
    %v118 = vrot.slane %v117, 2
    %v119 = vadd.f32 %v117, %v118
    %v120 = vrot.slane %v119, 1
    %v121 = vadd.f32 %v119, %v120
    %v122 = vadd.f32 %v106, %v108
    %v123 = vadd.f32 %v122, %v110
    %v124 = vadd.f32 %v123, %v112
    %v125 = vrot.slane %v124, 4
    %v126 = vadd.f32 %v124, %v125
    %v127 = vrot.slane %v126, 2
    %v128 = vadd.f32 %v126, %v127
    %v129 = vrot.slane %v128, 1
    %v130 = vadd.f32 %v128, %v129
    %132 = vset.pattern.permute.xlu0 3
    %133 = vperm.xlu0 %132, %v17
    %v134 = vpop.permute.xlu0 %133
    %v136 = vadd.f32 %v121, %v134
    %v137 = vadd.f32 %v130, %v134
    %v140 = vcombine.low %v136, %v137
    %v142 = vunpack.c.l.s4 1966171168
    %v143 = vunpack.c.0.s8 %v142
    %v144 = vlaneseq
    %v145 = vshrl.u32 %v144, 7
    %v146 = vsub.s32 %v143, %v145
    %v147 = vrot.slane %v140, %v146
    %v149 = vunpack.c.l.s4 1966171168
    %v150 = vunpack.c.0.s8 %v149
    %v151 = vlaneseq
    %v152 = vshrl.u32 %v151, 7
    %v153 = vsub.s32 %v150, %v152
    %v154 = vrot.slane %v147, %v153
    %v156 = vlaneseq
    %vm157 = vcmp.ge.s32.totalorder %v156, 0
    %vm158 = vcmp.lt.s32.totalorder %v156, 256
    %vm159 = vmand %vm157, %vm158
    %160 = vst.msk [vmem:[#allocation2] sm:$0x3] %vm159, %v154
    // Predicated region
    $region10: #{tpu_custom_call.1} parent=1 // pred_check
      _
    $region11: #{tpu_custom_call.1} parent=1 // pred_check_branch
      %162 = sbr.rel (0) target = $region13
    $region12: #{tpu_custom_call.1} parent=1 // pred_region
      %s164 = ssub.s32 32, 32
      %165 = vsyncadd [#allocation3], %s164
      %s167 = sshll.u32 [#allocation2], 4
      %s168 = int_to_ptr.vmem [resolvable:$true] %s167
      %170 = dma.vmem_to_hbm [thread:$0]  %s168, 32, %s2, [#allocation3]
    $region13: #{tpu_custom_call.1} parent=1 // pred_fallthru
      _
    // Predicated region
    $region14: #{tpu_custom_call.1} parent=1 // pred_check
      _
    $region15: #{tpu_custom_call.1} parent=1 // pred_check_branch
      %172 = sbr.rel (0) target = $region17
    $region16: #{tpu_custom_call.1} parent=1 // pred_region
      %173 = dma.done [#allocation3], 32
    $region17: #{tpu_custom_call.1} parent=1 // pred_fallthru
      _
    %174 = vsyncpa [#allocation3], 1

</llo_original>
